<compile_context>
chip_gen: v7x
topology: tpu7x:2x2x1
jax: 0.10.0
libtpu: 0.0.40
codegen_flags: <defaults>
</compile_context>

<pallas_src>
import functools

import jax
import jax.numpy as jnp
from jax import lax
from jax.experimental import pallas as pl
from jax.experimental.pallas import tpu as pltpu


_LANE = 128


def _cdiv(a, b):
    return -(-a // b)


def _round_up(x, m):
    return ((x + m - 1) // m) * m


def _sublane_multiple(dtype):
    # second-to-last block dim must be a multiple of: f32 -> 8, bf16 -> 16, int8/fp8 -> 32
    itemsize = jnp.dtype(dtype).itemsize
    return 8 * max(1, 4 // itemsize)


def _vmem_params():
    """(block_budget_bytes, vmem_limit_bytes) per TPU generation."""
    try:
        cap = pltpu.get_tpu_info().vmem_capacity_bytes
    except Exception:  # conservative fallback if the query is unavailable
        cap = 64 * 1024 * 1024
    if cap >= 128 * 1024 * 1024:        # v5e / v6e: 128 MiB VMEM
        return 32 * 1024 * 1024, 96 * 1024 * 1024
    return 20 * 1024 * 1024, 48 * 1024 * 1024   # v7x: 64 MiB per TensorCore


def _pick_row_tile(rows, width, dtype, block_budget):
    """Largest row tile whose double-buffered (in + out) blocks fit the budget,
    rebalanced so the grid has an even number of >=2 roughly equal steps
    whenever there is enough work (v7x megacore balance)."""
    itemsize = jnp.dtype(dtype).itemsize
    sub = _sublane_multiple(dtype)
    # 2 (double buffer) * 2 (in + out) * tm * width * itemsize <= budget
    tm = block_budget // (4 * width * itemsize)
    tm = max(sub, (tm // sub) * sub)
    tm = min(tm, _round_up(rows, sub))
    if rows >= 2 * sub:
        steps = _cdiv(rows, tm)
        steps = max(2, steps + (steps % 2))        # >= 2 and even
        tm = max(sub, _round_up(_cdiv(rows, steps), sub))
    return tm


def _dot_exact(lhs_f32, rhs_bf16):
    """f32-accurate matmul against an exactly-bf16-representable RHS using a
    manual hi/lo bf16 split of the LHS: 2 native single-pass MXU matmuls."""
    hi = lhs_f32.astype(jnp.bfloat16)
    lo = (lhs_f32 - hi.astype(jnp.float32)).astype(jnp.bfloat16)
    return (jnp.dot(hi, rhs_bf16, preferred_element_type=jnp.float32)
            + jnp.dot(lo, rhs_bf16, preferred_element_type=jnp.float32))


def _layernorm_kernel(x_ref, gamma_ref, beta_ref, o_ref, *, eps, inv_dim):
    """Plain path: normalize over the full lane axis of each block row."""
    x = x_ref[...].astype(jnp.float32)                                    # (tm, D)
    mean = jnp.sum(x, axis=-1, keepdims=True) * inv_dim                   # (tm, 1)
    centered = x - mean
    var = jnp.sum(centered * centered, axis=-1, keepdims=True) * inv_dim  # biased var
    inv_std = lax.rsqrt(var + eps)
    o_ref[...] = (gamma_ref[...] * (centered * inv_std) + beta_ref[...]).astype(o_ref.dtype)


def _layernorm_folded_kernel(x_ref, gamma_ref, beta_ref, msum_ref, o_ref, *, eps, inv_dim):
    """Lane-folded path: each block row packs k independent length-D segments
    along the 128-wide lane axis.  Per-segment sums are computed (and broadcast
    back) with a block-diagonal 0/1 sum matrix on the MXU; the hi/lo bf16 split
    keeps ~f32 accuracy at 2 single-pass matmuls per reduction.  All vector
    loads/stores stay lane-dense (unmasked vst)."""
    x = x_ref[...].astype(jnp.float32)                 # (tm, k*D)
    msum = msum_ref[...]                               # (k*D, k*D) bf16, 0/1 block-diagonal
    mean = _dot_exact(x, msum) * inv_dim               # per-segment mean, broadcast
    centered = x - mean
    var = _dot_exact(centered * centered, msum) * inv_dim   # per-segment biased var
    inv_std = lax.rsqrt(var + eps)
    o_ref[...] = (gamma_ref[...] * (centered * inv_std) + beta_ref[...]).astype(o_ref.dtype)


def layer_norm(x, gamma, beta, eps=1e-5):
    """LayerNorm over the last axis of x, matching the PyTorch module."""
    orig_shape = x.shape
    dim = orig_shape[-1]
    rows = 1
    for s in orig_shape[:-1]:
        rows *= s

    block_budget, vmem_limit = _vmem_params()
    itemsize = jnp.dtype(x.dtype).itemsize

    x2 = x.reshape(rows, dim)
    gamma32 = gamma.reshape(1, dim).astype(jnp.float32)   # cast hoisted out of the kernel
    beta32 = beta.reshape(1, dim).astype(jnp.float32)

    # Fold small feature dims into full 128-lane rows when possible.
    fold = (dim < _LANE) and (_LANE % dim == 0) and (rows % (_LANE // dim) == 0)

    if fold:
        k = _LANE // dim
        width = k * dim                                   # == 128
        work_rows = rows // k
        x_in = x2.reshape(work_rows, width)               # pure row-major reshape
        gamma_in = jnp.tile(gamma32, (1, k))
        beta_in = jnp.tile(beta32, (1, k))
        # Block-diagonal segment-sum matrix; entries 0/1 are exact in bf16.
        msum = jnp.kron(jnp.eye(k, dtype=jnp.float32),
                        jnp.ones((dim, dim), dtype=jnp.float32)).astype(jnp.bfloat16)
        tm = _pick_row_tile(work_rows, width, x.dtype, block_budget)
        kernel = functools.partial(_layernorm_folded_kernel, eps=eps, inv_dim=1.0 / dim)
        fixed_specs = [
            pl.BlockSpec((1, width), lambda i: (0, 0)),      # gamma (resident)
            pl.BlockSpec((1, width), lambda i: (0, 0)),      # beta  (resident)
            pl.BlockSpec((width, width), lambda i: (0, 0)),  # sum matrix (resident)
        ]
        extra_inputs = (gamma_in, beta_in, msum)
        matmul_flops = 2 * 2 * 2 * work_rows * width * width   # hi/lo mean + var matmuls
        extra_bytes = width * width * 2
    else:
        width = dim
        work_rows = rows
        x_in = x2
        tm = _pick_row_tile(work_rows, width, x.dtype, block_budget)
        kernel = functools.partial(_layernorm_kernel, eps=eps, inv_dim=1.0 / dim)
        fixed_specs = [
            pl.BlockSpec((1, width), lambda i: (0, 0)),      # gamma (resident)
            pl.BlockSpec((1, width), lambda i: (0, 0)),      # beta  (resident)
        ]
        extra_inputs = (gamma32, beta32)
        matmul_flops = 0
        extra_bytes = 0

    steps = _cdiv(work_rows, tm)
    # Deep buffering only helps when tiles are forced small and the grid is long.
    x_block_bytes = tm * width * itemsize
    if x_block_bytes < (1 << 20) and steps >= 4:
        x_spec = pl.BlockSpec((tm, width), lambda i: (i, 0), pipeline_mode=pl.Buffered(3))
    else:
        x_spec = pl.BlockSpec((tm, width), lambda i: (i, 0))

    cost = pl.CostEstimate(
        flops=int(8 * rows * dim + matmul_flops),
        transcendentals=int(rows),
        bytes_accessed=int(2 * rows * dim * itemsize + 2 * dim * 4 + extra_bytes),
    )

    out = pl.pallas_call(
        kernel,
        out_shape=jax.ShapeDtypeStruct((work_rows, width), x.dtype),
        grid_spec=pltpu.PrefetchScalarGridSpec(
            num_scalar_prefetch=0,
            grid=(steps,),
            in_specs=[x_spec] + fixed_specs,
            out_specs=pl.BlockSpec((tm, width), lambda i: (i, 0)),
        ),
        compiler_params=pltpu.CompilerParams(
            dimension_semantics=("parallel",),          # lets v7x shard rows across both TCs
            vmem_limit_bytes=vmem_limit,
        ),
        cost_estimate=cost,
    )(x_in, *extra_inputs)

    return out.reshape(orig_shape)


if __name__ == "__main__":
    key = jax.random.PRNGKey(0)
    k1, k2 = jax.random.split(key)
    eps = 1e-5

    def ref_ln(x, gamma, beta):
        mean = jnp.mean(x, axis=-1, keepdims=True)
        var = jnp.mean((x - mean) ** 2, axis=-1, keepdims=True)
        return gamma * ((x - mean) / jnp.sqrt(var + eps)) + beta

    # Folded (dim < 128) path — matches the module defaults (gama=ones, beta=ones).
    batch, seq, hidden = 2, 8, 32
    x = jax.random.normal(k1, (batch, seq, hidden), dtype=jnp.float32)
    gamma = jnp.ones((hidden,), dtype=jnp.float32)
    beta = jnp.ones((hidden,), dtype=jnp.float32)
    out = jax.block_until_ready(layer_norm(x, gamma, beta, eps=eps))
    ref = ref_ln(x, gamma, beta)
    assert jnp.allclose(out, ref, atol=2e-5, rtol=2e-5), float(jnp.max(jnp.abs(out - ref)))

    # Plain (dim >= 128) path.
    hidden2 = 256
    x2 = jax.random.normal(k2, (batch, seq, hidden2), dtype=jnp.float32)
    gamma2 = jnp.ones((hidden2,), dtype=jnp.float32)
    beta2 = jnp.ones((hidden2,), dtype=jnp.float32)
    out2 = jax.block_until_ready(layer_norm(x2, gamma2, beta2, eps=eps))
    ref2 = ref_ln(x2, gamma2, beta2)
    assert jnp.allclose(out2, ref2, atol=2e-5, rtol=2e-5), float(jnp.max(jnp.abs(out2 - ref2)))

    print("KERNEL_OK")
</pallas_src>

<mosaic_0001>
module attributes {stable_mosaic.version = 11 : i64} {
  func.func @_layernorm_folded_kernel(%arg0: i32, %arg1: memref<8x128xf32, #tpu.memory_space<vmem>>, %arg2: memref<1x128xf32, #tpu.memory_space<vmem>>, %arg3: memref<1x128xf32, #tpu.memory_space<vmem>>, %arg4: memref<128x128xbf16, #tpu.memory_space<vmem>>, %arg5: memref<8x128xf32, #tpu.memory_space<vmem>>) attributes {dimension_semantics = [#tpu.dimension_semantics<parallel>], iteration_bounds = array<i64: 1>, scalar_prefetch = 0 : i64, scratch_operands = 0 : i64, tpu.core_type = #tpu.core_type<tc>, window_params = [{transform_indices = @transform_0, window_bounds = array<i64: 8, 128>}, {pipeline_mode = #tpu.pipeline_mode<synchronous>, transform_indices = @transform_1, window_bounds = array<i64: 1, 128>}, {pipeline_mode = #tpu.pipeline_mode<synchronous>, transform_indices = @transform_2, window_bounds = array<i64: 1, 128>}, {pipeline_mode = #tpu.pipeline_mode<synchronous>, transform_indices = @transform_3, window_bounds = array<i64: 128, 128>}, {transform_indices = @transform_4, window_bounds = array<i64: 8, 128>}]} {
    %c0 = arith.constant 0 : index
    %c0_0 = arith.constant 0 : index
    %0 = vector.load %arg1[%c0, %c0_0] : memref<8x128xf32, #tpu.memory_space<vmem>>, vector<8x128xf32>
    %c0_1 = arith.constant 0 : index
    %c0_2 = arith.constant 0 : index
    %1 = vector.load %arg4[%c0_1, %c0_2] : memref<128x128xbf16, #tpu.memory_space<vmem>>, vector<128x128xbf16>
    %2 = arith.truncf %0 : vector<8x128xf32> to vector<8x128xbf16>
    %3 = arith.extf %2 : vector<8x128xbf16> to vector<8x128xf32>
    %4 = arith.subf %0, %3 : vector<8x128xf32>
    %5 = arith.truncf %4 : vector<8x128xf32> to vector<8x128xbf16>
    %cst = arith.constant dense<0.000000e+00> : vector<8x128xf32>
    %6 = tpu.matmul %2, %1, %cst {dimension_numbers = #tpu.dot_dimension_numbers<[1], [0], [0], [1], [0, 0, 1, 1], [], []>} : vector<8x128xbf16>, vector<128x128xbf16>, vector<8x128xf32> -> vector<8x128xf32>
    %cst_3 = arith.constant dense<0.000000e+00> : vector<8x128xf32>
    %7 = tpu.matmul %5, %1, %cst_3 {dimension_numbers = #tpu.dot_dimension_numbers<[1], [0], [0], [1], [0, 0, 1, 1], [], []>} : vector<8x128xbf16>, vector<128x128xbf16>, vector<8x128xf32> -> vector<8x128xf32>
    %8 = arith.addf %6, %7 : vector<8x128xf32>
    %cst_4 = arith.constant 3.125000e-02 : f32
    %9 = vector.broadcast %cst_4 : f32 to vector<8x128xf32>
    %10 = arith.mulf %8, %9 : vector<8x128xf32>
    %11 = arith.subf %0, %10 : vector<8x128xf32>
    %12 = arith.mulf %11, %11 : vector<8x128xf32>
    %13 = arith.truncf %12 : vector<8x128xf32> to vector<8x128xbf16>
    %14 = arith.extf %13 : vector<8x128xbf16> to vector<8x128xf32>
    %15 = arith.subf %12, %14 : vector<8x128xf32>
    %16 = arith.truncf %15 : vector<8x128xf32> to vector<8x128xbf16>
    %cst_5 = arith.constant dense<0.000000e+00> : vector<8x128xf32>
    %17 = tpu.matmul %13, %1, %cst_5 {dimension_numbers = #tpu.dot_dimension_numbers<[1], [0], [0], [1], [0, 0, 1, 1], [], []>} : vector<8x128xbf16>, vector<128x128xbf16>, vector<8x128xf32> -> vector<8x128xf32>
    %cst_6 = arith.constant dense<0.000000e+00> : vector<8x128xf32>
    %18 = tpu.matmul %16, %1, %cst_6 {dimension_numbers = #tpu.dot_dimension_numbers<[1], [0], [0], [1], [0, 0, 1, 1], [], []>} : vector<8x128xbf16>, vector<128x128xbf16>, vector<8x128xf32> -> vector<8x128xf32>
    %19 = arith.addf %17, %18 : vector<8x128xf32>
    %cst_7 = arith.constant 3.125000e-02 : f32
    %20 = vector.broadcast %cst_7 : f32 to vector<8x128xf32>
    %21 = arith.mulf %19, %20 : vector<8x128xf32>
    %cst_8 = arith.constant 9.99999974E-6 : f32
    %22 = vector.broadcast %cst_8 : f32 to vector<8x128xf32>
    %23 = arith.addf %21, %22 : vector<8x128xf32>
    %24 = math.rsqrt %23 : vector<8x128xf32>
    %c0_9 = arith.constant 0 : index
    %c0_10 = arith.constant 0 : index
    %25 = vector.load %arg2[%c0_9, %c0_10] : memref<1x128xf32, #tpu.memory_space<vmem>>, vector<1x128xf32>
    %26 = arith.mulf %11, %24 : vector<8x128xf32>
    %27 = vector.broadcast %25 : vector<1x128xf32> to vector<8x128xf32>
    %28 = arith.mulf %27, %26 : vector<8x128xf32>
    %c0_11 = arith.constant 0 : index
    %c0_12 = arith.constant 0 : index
    %29 = vector.load %arg3[%c0_11, %c0_12] : memref<1x128xf32, #tpu.memory_space<vmem>>, vector<1x128xf32>
    %30 = vector.broadcast %29 : vector<1x128xf32> to vector<8x128xf32>
    %31 = arith.addf %28, %30 : vector<8x128xf32>
    %c0_13 = arith.constant 0 : index
    %c0_14 = arith.constant 0 : index
    %32 = vector.load %arg5[%c0_13, %c0_14] : memref<8x128xf32, #tpu.memory_space<vmem>>, vector<8x128xf32>
    tpu.vector_store %arg5[%c0_13, %c0_14], %31 {strides = array<i32>} : memref<8x128xf32, #tpu.memory_space<vmem>>, vector<8x128xf32>,
    return
  }
  func.func @transform_0(%arg0: i32) -> (i32, i32) {
    %c0_i32 = arith.constant 0 : i32
    %c0_i32_0 = arith.constant 0 : i32
    return %arg0, %c0_i32 : i32, i32
  }
  func.func @transform_1(%arg0: i32) -> (i32, i32) {
    %c0_i32 = arith.constant 0 : i32
    %c0_i32_0 = arith.constant 0 : i32
    %c0_i32_1 = arith.constant 0 : i32
    return %c0_i32, %c0_i32_0 : i32, i32
  }
  func.func @transform_2(%arg0: i32) -> (i32, i32) {
    %c0_i32 = arith.constant 0 : i32
    %c0_i32_0 = arith.constant 0 : i32
    %c0_i32_1 = arith.constant 0 : i32
    return %c0_i32, %c0_i32_0 : i32, i32
  }
  func.func @transform_3(%arg0: i32) -> (i32, i32) {
    %c0_i32 = arith.constant 0 : i32
    %c0_i32_0 = arith.constant 0 : i32
    %c0_i32_1 = arith.constant 0 : i32
    return %c0_i32, %c0_i32_0 : i32, i32
  }
  func.func @transform_4(%arg0: i32) -> (i32, i32) {
    %c0_i32 = arith.constant 0 : i32
    %c0_i32_0 = arith.constant 0 : i32
    return %arg0, %c0_i32 : i32, i32
  }
}

</mosaic_0001>

<llo_original>
// kernel: tpu_custom_call.1
$region0: #{tpu_custom_call.1}
  #allocation0 [shape = 'u32[]', space=smem, size = 0x4, offset = 0x4, fixed_abs, tag = 'smem constant byte address 0x4 - core index']
  #allocation1 [shape = 'u32[144,128]{1,0:T(1,128)}', space=vmem, size = 0x12000, scoped, tag = 'internal scratch']
  %s0 = inlined_call_operand.hbm [shape: f32[4,128], index: 0, kind: input, shape index: {}]
  %s1 = inlined_call_operand.vmem [shape: f32[1,128], index: 1, kind: input, shape index: {}]
  %s2 = inlined_call_operand.vmem [shape: f32[1,128], index: 2, kind: input, shape index: {}]
  %s3 = inlined_call_operand.hbm [shape: bf16[128,128], index: 3, kind: input, shape index: {}]
  %s4 = inlined_call_operand.hbm [shape: f32[4,128], index: 4, kind: output, shape index: {}]
  %s5 = sld [smem:[#allocation0]]
  $region34: #{tpu_custom_call.1} parent=0
    _
  %s7 = ssub.s32 1, %s5
  %s8 = scalar_select 0, %s7, %s5
  $region1: #{tpu_custom_call.1} parent=0
    #allocation2 [shape = 'u8[4096]{0}', space=vmem, size = 0x1000, scoped, tag = 'input window, operand 0, single buffered']
    #allocation3 [shape = 's32[1]{0}', space=sflag, size = 0x4, scoped, tag = 'scoped memory for tpu_custom_call.1']
    #allocation4 [shape = 's32[1]{0}', space=sflag, size = 0x4, scoped, tag = 'scoped memory for tpu_custom_call.1']
    #allocation5 [shape = 'u8[32768]{0}', space=vmem, size = 0x8000, scoped, tag = 'input window, operand 3, single buffered']
    #allocation6 [shape = 's32[1]{0}', space=sflag, size = 0x4, scoped, tag = 'scoped memory for tpu_custom_call.1']
    #allocation7 [shape = 'u8[4096]{0}', space=vmem, size = 0x1000, scoped, tag = 'output window, operand 0, single buffered']
    %9 = vsyncpa [#allocation3], 0
    %10 = vsyncpa [#allocation6], 0
    %11 = vsyncpa [#allocation4], 0
    // Predicated region
    $region2: #{tpu_custom_call.1} parent=1 // pred_check
      _
    $region3: #{tpu_custom_call.1} parent=1 // pred_check_branch
      %13 = sbr.rel (0) target = $region5
    $region4: #{tpu_custom_call.1} parent=1 // pred_region
      %s15 = ssub.s32 128, 64
      %16 = vsyncadd [#allocation3], %s15
      %s17 = sshll.u32 [#allocation2], 4
      %s18 = int_to_ptr.vmem [resolvable:$true] %s17
      %23 = dma.hbm_to_vmem [thread:$0]  %s0, 64, %s18, [#allocation3], 64, 64, 4
    $region5: #{tpu_custom_call.1} parent=1 // pred_fallthru
      _
    // Predicated region
    $region6: #{tpu_custom_call.1} parent=1 // pred_check
      _
    $region7: #{tpu_custom_call.1} parent=1 // pred_check_branch
      %25 = sbr.rel (0) target = $region9
    $region8: #{tpu_custom_call.1} parent=1 // pred_region
      _
    $region9: #{tpu_custom_call.1} parent=1 // pred_fallthru
      _
    // Predicated region
    $region10: #{tpu_custom_call.1} parent=1 // pred_check
      _
    $region11: #{tpu_custom_call.1} parent=1 // pred_check_branch
      %27 = sbr.rel (0) target = $region13
    $region12: #{tpu_custom_call.1} parent=1 // pred_region
      _
    $region13: #{tpu_custom_call.1} parent=1 // pred_fallthru
      _
    // Predicated region
    $region14: #{tpu_custom_call.1} parent=1 // pred_check
      _
    $region15: #{tpu_custom_call.1} parent=1 // pred_check_branch
      %29 = sbr.rel (0) target = $region17
    $region16: #{tpu_custom_call.1} parent=1 // pred_region
      %s31 = ssub.s32 1024, 1024
      %32 = vsyncadd [#allocation6], %s31
      %s33 = sshll.u32 [#allocation5], 4
      %s34 = int_to_ptr.vmem [resolvable:$true] %s33
      %39 = dma.hbm_to_vmem [thread:$0]  %s3, 1024, %s34, [#allocation6], 64, 64, 4
    $region17: #{tpu_custom_call.1} parent=1 // pred_fallthru
      _
    // Predicated region
    $region18: #{tpu_custom_call.1} parent=1 // pred_check
      _
    $region19: #{tpu_custom_call.1} parent=1 // pred_check_branch
      %41 = sbr.rel (0) target = $region21
    $region20: #{tpu_custom_call.1} parent=1 // pred_region
      %42 = dma.done [#allocation3], 128
    $region21: #{tpu_custom_call.1} parent=1 // pred_fallthru
      _
    // Predicated region
    $region22: #{tpu_custom_call.1} parent=1 // pred_check
      _
    $region23: #{tpu_custom_call.1} parent=1 // pred_check_branch
      %44 = sbr.rel (0) target = $region25
    $region24: #{tpu_custom_call.1} parent=1 // pred_region
      %45 = dma.done [#allocation6], 1024
    $region25: #{tpu_custom_call.1} parent=1 // pred_fallthru
      _
    %v47 = vld [vmem:[#allocation2] sm:$0xff]
    %v48 = vld [vmem:[#allocation5] sm:$0xf]
    %v49 = vld [vmem:[#allocation5 + $0x4] sm:$0xf]
    %v50 = vld [vmem:[#allocation5 + $0x8] sm:$0xf]
    %v51 = vld [vmem:[#allocation5 + $0xc] sm:$0xf]
    %v52 = vld [vmem:[#allocation5 + $0x10] sm:$0xf]
    %v53 = vld [vmem:[#allocation5 + $0x14] sm:$0xf]
    %v54 = vld [vmem:[#allocation5 + $0x18] sm:$0xf]
    %v55 = vld [vmem:[#allocation5 + $0x1c] sm:$0xf]
    %v56 = vld [vmem:[#allocation5 + $0x20] sm:$0xf]
    %v57 = vld [vmem:[#allocation5 + $0x24] sm:$0xf]
    %v58 = vld [vmem:[#allocation5 + $0x28] sm:$0xf]
    %v59 = vld [vmem:[#allocation5 + $0x2c] sm:$0xf]
    %v60 = vld [vmem:[#allocation5 + $0x30] sm:$0xf]
    %v61 = vld [vmem:[#allocation5 + $0x34] sm:$0xf]
    %v62 = vld [vmem:[#allocation5 + $0x38] sm:$0xf]
    %v63 = vld [vmem:[#allocation5 + $0x3c] sm:$0xf]
    %v64 = vpack.c.bf16 %v47, %v47
    %v65 = vunpack.c.l.bf16 %v64
    %v66 = vsub.f32 %v47, %v65
    %v67 = vpack.c.bf16 %v66, %v66
    %v84 = vunpack.c.l.b16 %v48
    %v85 = vunpack.c.l.b16 %v49
    %v86 = vunpack.c.l.b16 %v50
    %v87 = vunpack.c.l.b16 %v51
    %v88 = vunpack.c.l.b16 %v52
    %v89 = vunpack.c.l.b16 %v53
    %v90 = vunpack.c.l.b16 %v54
    %v91 = vunpack.c.l.b16 %v55
    %v92 = vunpack.c.l.b16 %v56
    %v93 = vunpack.c.l.b16 %v57
    %v94 = vunpack.c.l.b16 %v58
    %v95 = vunpack.c.l.b16 %v59
    %v96 = vunpack.c.l.b16 %v60
    %v97 = vunpack.c.l.b16 %v61
    %v98 = vunpack.c.l.b16 %v62
    %v99 = vunpack.c.l.b16 %v63
    %v100 = vpack.c.b16 %v85, %v84
    %v101 = vpack.c.b16 %v87, %v86
    %v102 = vpack.c.b16 %v89, %v88
    %v103 = vpack.c.b16 %v91, %v90
    %v104 = vpack.c.b16 %v93, %v92
    %v105 = vpack.c.b16 %v95, %v94
    %v106 = vpack.c.b16 %v97, %v96
    %v107 = vpack.c.b16 %v99, %v98
    %116 = vmatprep.subr.bf16.mxu0 0
    %117 = vmatpush1.bf16.msra.mxu0 %v100
    %118 = vmatprep.subr.bf16.mxu0 0
    %119 = vmatpush1.bf16.msra.mxu0 %v101
    %120 = vmatprep.subr.bf16.mxu0 0
    %121 = vmatpush1.bf16.msra.mxu0 %v102
    %122 = vmatprep.subr.bf16.mxu0 0
    %123 = vmatpush1.bf16.msra.mxu0 %v103
    %124 = vmatprep.subr.bf16.mxu0 0
    %125 = vmatpush1.bf16.msra.mxu0 %v104
    %126 = vmatprep.subr.bf16.mxu0 0
    %127 = vmatpush1.bf16.msra.mxu0 %v105
    %128 = vmatprep.subr.bf16.mxu0 0
    %129 = vmatpush1.bf16.msra.mxu0 %v106
    %130 = vmatprep.subr.bf16.mxu0 0
    %131 = vmatpush1.bf16.msra.mxu0 %v107
    %132 = vmatprep.subr.bf16.mxu0 0
    %133 = vmatpush1.bf16.msra.mxu0 0
    %134 = vmatprep.subr.bf16.mxu0 0
    %135 = vmatpush1.bf16.msra.mxu0 0
    %136 = vmatprep.subr.bf16.mxu0 0
    %137 = vmatpush1.bf16.msra.mxu0 0
    %138 = vmatprep.subr.bf16.mxu0 0
    %139 = vmatpush1.bf16.msra.mxu0 0
    %140 = vmatprep.subr.bf16.mxu0 0
    %141 = vmatpush1.bf16.msra.mxu0 0
    %142 = vmatprep.subr.bf16.mxu0 0
    %143 = vmatpush1.bf16.msra.mxu0 0
    %144 = vmatprep.subr.bf16.mxu0 0
    %145 = vmatpush1.bf16.msra.mxu0 0
    %146 = vmatprep.subr.bf16.mxu0 0
    %147 = vmatpush1.bf16.msra.mxu0 0
    %148 = vmatprep.mubr.bf16.mxu0 0
    %149 = vmatmul.mubr.bf16.gmra.mrb[0].mxu0 %v67
    %v150 = vpop.f32.mrb[0].mxu0
    %v151 = vadd.f32 0.0, %v150
    %v152 = vpop.f32.mrb[0].mxu0
    %v153 = vpop.f32.mrb[0].mxu0
    %v154 = vpop.f32.mrb[0].mxu0
    %155 = vdwg.mxu0
    %156 = vmatprep.subr.bf16.mxu0 0
    %157 = vmatpush1.bf16.msra.mxu0 %v100
    %158 = vmatprep.subr.bf16.mxu0 0
    %159 = vmatpush1.bf16.msra.mxu0 %v101
    %160 = vmatprep.subr.bf16.mxu0 0
    %161 = vmatpush1.bf16.msra.mxu0 %v102
    %162 = vmatprep.subr.bf16.mxu0 0
    %163 = vmatpush1.bf16.msra.mxu0 %v103
    %164 = vmatprep.subr.bf16.mxu0 0
    %165 = vmatpush1.bf16.msra.mxu0 %v104
    %166 = vmatprep.subr.bf16.mxu0 0
    %167 = vmatpush1.bf16.msra.mxu0 %v105
    %168 = vmatprep.subr.bf16.mxu0 0
    %169 = vmatpush1.bf16.msra.mxu0 %v106
    %170 = vmatprep.subr.bf16.mxu0 0
    %171 = vmatpush1.bf16.msra.mxu0 %v107
    %172 = vmatprep.subr.bf16.mxu0 0
    %173 = vmatpush1.bf16.msra.mxu0 0
    %174 = vmatprep.subr.bf16.mxu0 0
    %175 = vmatpush1.bf16.msra.mxu0 0
    %176 = vmatprep.subr.bf16.mxu0 0
    %177 = vmatpush1.bf16.msra.mxu0 0
    %178 = vmatprep.subr.bf16.mxu0 0
    %179 = vmatpush1.bf16.msra.mxu0 0
    %180 = vmatprep.subr.bf16.mxu0 0
    %181 = vmatpush1.bf16.msra.mxu0 0
    %182 = vmatprep.subr.bf16.mxu0 0
    %183 = vmatpush1.bf16.msra.mxu0 0
    %184 = vmatprep.subr.bf16.mxu0 0
    %185 = vmatpush1.bf16.msra.mxu0 0
    %186 = vmatprep.subr.bf16.mxu0 0
    %187 = vmatpush1.bf16.msra.mxu0 0
    %188 = vmatprep.mubr.bf16.mxu0 0
    %189 = vmatmul.mubr.bf16.gmra.mrb[0].mxu0 %v64
    %v190 = vpop.f32.mrb[0].mxu0
    %v191 = vadd.f32 %v151, %v190
    %v192 = vpop.f32.mrb[0].mxu0
    %v193 = vpop.f32.mrb[0].mxu0
    %v194 = vpop.f32.mrb[0].mxu0
    %195 = vdwg.mxu0
    %v196 = vmul.f32 %v191, 0.03125
    %v197 = vsub.f32 %v47, %v196
    %v198 = vmul.f32 %v197, %v197
    %v199 = vpack.c.bf16 %v198, %v198
    %v200 = vunpack.c.l.bf16 %v199
    %v201 = vsub.f32 %v198, %v200
    %v202 = vpack.c.bf16 %v201, %v201
    %203 = vmatprep.subr.bf16.mxu0 0
    %204 = vmatpush1.bf16.msra.mxu0 %v100
    %205 = vmatprep.subr.bf16.mxu0 0
    %206 = vmatpush1.bf16.msra.mxu0 %v101
    %207 = vmatprep.subr.bf16.mxu0 0
    %208 = vmatpush1.bf16.msra.mxu0 %v102
    %209 = vmatprep.subr.bf16.mxu0 0
    %210 = vmatpush1.bf16.msra.mxu0 %v103
    %211 = vmatprep.subr.bf16.mxu0 0
    %212 = vmatpush1.bf16.msra.mxu0 %v104
    %213 = vmatprep.subr.bf16.mxu0 0
    %214 = vmatpush1.bf16.msra.mxu0 %v105
    %215 = vmatprep.subr.bf16.mxu0 0
    %216 = vmatpush1.bf16.msra.mxu0 %v106
    %217 = vmatprep.subr.bf16.mxu0 0
    %218 = vmatpush1.bf16.msra.mxu0 %v107
    %219 = vmatprep.subr.bf16.mxu0 0
    %220 = vmatpush1.bf16.msra.mxu0 0
    %221 = vmatprep.subr.bf16.mxu0 0
    %222 = vmatpush1.bf16.msra.mxu0 0
    %223 = vmatprep.subr.bf16.mxu0 0
    %224 = vmatpush1.bf16.msra.mxu0 0
    %225 = vmatprep.subr.bf16.mxu0 0
    %226 = vmatpush1.bf16.msra.mxu0 0
    %227 = vmatprep.subr.bf16.mxu0 0
    %228 = vmatpush1.bf16.msra.mxu0 0
    %229 = vmatprep.subr.bf16.mxu0 0
    %230 = vmatpush1.bf16.msra.mxu0 0
    %231 = vmatprep.subr.bf16.mxu0 0
    %232 = vmatpush1.bf16.msra.mxu0 0
    %233 = vmatprep.subr.bf16.mxu0 0
    %234 = vmatpush1.bf16.msra.mxu0 0
    %235 = vmatprep.mubr.bf16.mxu0 0
    %236 = vmatmul.mubr.bf16.gmra.mrb[0].mxu0 %v202
    %v237 = vpop.f32.mrb[0].mxu0
    %v238 = vadd.f32 0.0, %v237
    %v239 = vpop.f32.mrb[0].mxu0
    %v240 = vpop.f32.mrb[0].mxu0
    %v241 = vpop.f32.mrb[0].mxu0
    %242 = vdwg.mxu0
    %243 = vmatprep.subr.bf16.mxu0 0
    %244 = vmatpush1.bf16.msra.mxu0 %v100
    %245 = vmatprep.subr.bf16.mxu0 0
    %246 = vmatpush1.bf16.msra.mxu0 %v101
    %247 = vmatprep.subr.bf16.mxu0 0
    %248 = vmatpush1.bf16.msra.mxu0 %v102
    %249 = vmatprep.subr.bf16.mxu0 0
    %250 = vmatpush1.bf16.msra.mxu0 %v103
    %251 = vmatprep.subr.bf16.mxu0 0
    %252 = vmatpush1.bf16.msra.mxu0 %v104
    %253 = vmatprep.subr.bf16.mxu0 0
    %254 = vmatpush1.bf16.msra.mxu0 %v105
    %255 = vmatprep.subr.bf16.mxu0 0
    %256 = vmatpush1.bf16.msra.mxu0 %v106
    %257 = vmatprep.subr.bf16.mxu0 0
    %258 = vmatpush1.bf16.msra.mxu0 %v107
    %259 = vmatprep.subr.bf16.mxu0 0
    %260 = vmatpush1.bf16.msra.mxu0 0
    %261 = vmatprep.subr.bf16.mxu0 0
    %262 = vmatpush1.bf16.msra.mxu0 0
    %263 = vmatprep.subr.bf16.mxu0 0
    %264 = vmatpush1.bf16.msra.mxu0 0
    %265 = vmatprep.subr.bf16.mxu0 0
    %266 = vmatpush1.bf16.msra.mxu0 0
    %267 = vmatprep.subr.bf16.mxu0 0
    %268 = vmatpush1.bf16.msra.mxu0 0
    %269 = vmatprep.subr.bf16.mxu0 0
    %270 = vmatpush1.bf16.msra.mxu0 0
    %271 = vmatprep.subr.bf16.mxu0 0
    %272 = vmatpush1.bf16.msra.mxu0 0
    %273 = vmatprep.subr.bf16.mxu0 0
    %274 = vmatpush1.bf16.msra.mxu0 0
    %275 = vmatprep.mubr.bf16.mxu0 0
    %276 = vmatmul.mubr.bf16.gmra.mrb[0].mxu0 %v199
    %v277 = vpop.f32.mrb[0].mxu0
    %v278 = vadd.f32 %v238, %v277
    %v279 = vpop.f32.mrb[0].mxu0
    %v280 = vpop.f32.mrb[0].mxu0
    %v281 = vpop.f32.mrb[0].mxu0
    %282 = vdwg.mxu0
    %v283 = vmul.f32 %v278, 0.03125
    %v284 = vadd.f32 %v283, 1e-05
    %v285 = vrsqrt.pop %v284
    %v286 = vld [vmem:[%s1] sm:$0x1]
    %v287 = vmul.f32 %v197, %v285
    %v289 = vlaneseq
    %v290 = vshrl.u32 %v289, 7
    %v291 = vsub.s32 0, %v290
    %v292 = vrot.slane %v286, %v291
    %v294 = vmul.f32 %v292, %v287
    %v295 = vld [vmem:[%s2] sm:$0x1]
    %v297 = vlaneseq
    %v298 = vshrl.u32 %v297, 7
    %v299 = vsub.s32 0, %v298
    %v300 = vrot.slane %v295, %v299
    %v302 = vadd.f32 %v294, %v300
    %303 = vst [vmem:[#allocation7] sm:$0xff] %v302
    // Predicated region
    $region26: #{tpu_custom_call.1} parent=1 // pred_check
      _
    $region27: #{tpu_custom_call.1} parent=1 // pred_check_branch
      %305 = sbr.rel (0) target = $region29
    $region28: #{tpu_custom_call.1} parent=1 // pred_region
      %s307 = ssub.s32 128, 64
      %308 = vsyncadd [#allocation4], %s307
      %s309 = sshll.u32 [#allocation7], 4
      %s310 = int_to_ptr.vmem [resolvable:$true] %s309
      %315 = dma.vmem_to_hbm [thread:$0]  %s310, 64, %s4, [#allocation4], 64, 64, 4
    $region29: #{tpu_custom_call.1} parent=1 // pred_fallthru
      _
    // Predicated region
    $region30: #{tpu_custom_call.1} parent=1 // pred_check
      _
    $region31: #{tpu_custom_call.1} parent=1 // pred_check_branch
      %317 = sbr.rel (0) target = $region33
    $region32: #{tpu_custom_call.1} parent=1 // pred_region
      %318 = dma.done [#allocation4], 128
    $region33: #{tpu_custom_call.1} parent=1 // pred_fallthru
      _
    %319 = vsyncpa [#allocation3], 1
    %320 = vsyncpa [#allocation6], 1
    %321 = vsyncpa [#allocation4], 1

</llo_original>
